<compile_context>
chip_gen: v7x
topology: tpu7x:2x2x1
jax: 0.10.0
libtpu: 0.0.40
codegen_flags: <defaults>
</compile_context>

<pallas_src>
import functools

import jax
import jax.numpy as jnp
from jax import lax
from jax.experimental import pallas as pl
from jax.experimental.pallas import tpu as pltpu


# ---------------------------------------------------------------------------
# Kernels
# ---------------------------------------------------------------------------

def _resident_kernel(x_ref, w_ref, o_ref, *, num_head, head_dim, head_class):
    """All heads in one grid step; weights stay VMEM-resident across the grid.

    x_ref: (TB, feat_dim)                    activations (compute dtype)
    w_ref: (num_head, head_dim, head_class)  pre-transposed, scale-folded weights
    o_ref: (TB, num_classes)                 scaled logits
    """
    # TODO(synk): for peak MXU utilization pad head_dim / head_class to the MXU
    # granule (128 on v5e, 256 on v6e/v7x); unaligned static slices below stay
    # correct but use masked loads / stores.
    for h in range(num_head):                    # static unroll; num_head is tiny
        xh = x_ref[:, h * head_dim:(h + 1) * head_dim]        # (TB, head_dim)
        wh = w_ref[h]                                         # (head_dim, head_class)
        yh = lax.dot_general(                                 # x_h @ (W_h^T * s_h)
            xh, wh,
            dimension_numbers=(((1,), (0,)), ((), ())),       # no RHS lane-dim contraction
            preferred_element_type=jnp.float32,
        )
        o_ref[:, h * head_class:(h + 1) * head_class] = yh.astype(o_ref.dtype)


def _streamed_kernel(x_ref, w_ref, o_ref):
    """One (head, batch-tile) grid step; per-head weight blocks are streamed.

    x_ref: (TB, head_dim)             this head's feature slab for this batch tile
    w_ref: (1, head_dim, head_class)  this head's pre-transposed, scale-folded weights
    o_ref: (TB, head_class)           this head's slab of the output
    """
    o_ref[...] = lax.dot_general(
        x_ref[...], w_ref[0],
        dimension_numbers=(((1,), (0,)), ((), ())),
        preferred_element_type=jnp.float32,
    ).astype(o_ref.dtype)


# ---------------------------------------------------------------------------
# Wrapper
# ---------------------------------------------------------------------------

def _tpu_budgets():
    """Return (vmem_limit_bytes, max_batch_tile) tuned per TPU generation."""
    cap = None
    try:
        info = pltpu.get_tpu_info()
        for attr in ("vmem_capacity_bytes", "vmem_size_bytes", "vmem_bytes"):
            val = getattr(info, attr, None)
            if val:
                cap = int(val)
                break
    except Exception:  # API drift / interpret mode -> safe defaults below.
        cap = None
    if cap is None:
        return 48 * 1024 * 1024, 512              # safe on every generation
    if cap <= 96 * 1024 * 1024:                   # v7x: 64 MiB VMEM per TensorCore
        return 40 * 1024 * 1024, 512
    return 100 * 1024 * 1024, 1024                # v5e / v6e: 128 MiB VMEM


def _select_batch_tile(B, max_tile):
    """Batch tile: multiple of 8 (sublane), and >= 2 grid steps when B >= 16 so
    both TensorCores get work on dual-core parts (v7x); neutral on 1-TC chips."""
    if B > max_tile:
        return max_tile
    if B >= 16:
        half = (B + 1) // 2
        tb = ((half + 7) // 8) * 8
        if tb < B:
            return tb
    return B


def dot_product_classifier_forward(x, label, weights, scales, *, num_head,
                                   compute_dtype=None, batch_tile=None,
                                   weight_streaming=None):
    """Forward pass of DotProduct_Classifier.

    x:       (B, feat_dim)
    weights: (num_head, head_class, head_dim)  -- nn.Linear weights, PyTorch layout
    scales:  (num_classes,)
    Returns (logits, None); logits dtype == x.dtype (MXU accumulation in f32).
    """
    del label  # unused by the reference forward
    B, feat_dim = x.shape
    head_dim = feat_dim // num_head
    head_class = weights.shape[1]
    num_classes = num_head * head_class
    out_dtype = x.dtype

    vmem_limit, max_tile = _tpu_budgets()
    tb = batch_tile if batch_tile is not None else _select_batch_tile(B, max_tile)
    grid_b = pl.cdiv(B, tb)

    # Fold the per-class scales into the weights (f32, BEFORE any bf16 cast) and
    # pre-transpose once to (num_head, head_dim, head_class): the in-kernel
    # contraction then never touches the RHS lane dim (no per-step transpose).
    cd = compute_dtype if compute_dtype is not None else x.dtype
    w_folded = weights.astype(jnp.float32) * scales.astype(jnp.float32).reshape(
        num_head, head_class, 1)
    w_in = jnp.transpose(w_folded, (0, 2, 1)).astype(cd)   # (H, head_dim, head_class)
    x_in = x.astype(cd)

    weight_bytes = num_head * head_dim * head_class * jnp.dtype(cd).itemsize
    can_stream = (head_dim % 128 == 0) and (head_class % 128 == 0)
    if weight_streaming is None:
        weight_streaming = can_stream and weight_bytes > vmem_limit // 2
    if weight_streaming and not can_stream:
        raise ValueError("weight streaming requires head_dim % 128 == 0 and "
                         "head_class % 128 == 0 (pad in the caller).")

    if weight_streaming:
        # Heads on the leading (parallel) grid axis: each head's weight block is
        # DMA'd once per core and reused across all inner batch tiles.
        out = pl.pallas_call(
            _streamed_kernel,
            out_shape=jax.ShapeDtypeStruct((B, num_classes), out_dtype),
            grid_spec=pltpu.PrefetchScalarGridSpec(
                num_scalar_prefetch=0,
                grid=(num_head, grid_b),
                in_specs=[
                    pl.BlockSpec((tb, head_dim), lambda h, i: (i, h)),
                    pl.BlockSpec((1, head_dim, head_class), lambda h, i: (h, 0, 0)),
                ],
                out_specs=pl.BlockSpec((tb, head_class), lambda h, i: (i, h)),
            ),
            compiler_params=pltpu.CompilerParams(
                dimension_semantics=("parallel", "arbitrary"),
                vmem_limit_bytes=vmem_limit,
            ),
        )(x_in, w_in)
        return out, None

    kernel = functools.partial(
        _resident_kernel,
        num_head=num_head, head_dim=head_dim, head_class=head_class,
    )

    def build(single_buffer_weights):
        w_kwargs = {"pipeline_mode": pl.Buffered(1)} if single_buffer_weights else {}
        return pl.pallas_call(
            kernel,
            out_shape=jax.ShapeDtypeStruct((B, num_classes), out_dtype),
            grid_spec=pltpu.PrefetchScalarGridSpec(
                num_scalar_prefetch=0,
                grid=(grid_b,),
                in_specs=[
                    # x: i-th batch tile, full feature width (heads sliced in-kernel).
                    pl.BlockSpec((tb, feat_dim), lambda i: (i, 0)),
                    # weights: constant block index -> VMEM-resident, DMA'd once;
                    # single-buffered so residency doesn't double the footprint.
                    pl.BlockSpec((num_head, head_dim, head_class),
                                 lambda i: (0, 0, 0), **w_kwargs),
                ],
                out_specs=pl.BlockSpec((tb, num_classes), lambda i: (i, 0)),
            ),
            compiler_params=pltpu.CompilerParams(
                dimension_semantics=("parallel",),   # batch tiles split across TCs
                vmem_limit_bytes=vmem_limit,
            ),
        )

    try:
        out = jax.block_until_ready(build(single_buffer_weights=True)(x_in, w_in))
    except Exception:
        # pipeline_mode=pl.Buffered(1) not supported by this jax build: retry
        # with default double buffering (any genuine error re-raises here).
        out = build(single_buffer_weights=False)(x_in, w_in)
    return out, None


# ---------------------------------------------------------------------------
# Self-test
# ---------------------------------------------------------------------------

if __name__ == "__main__":
    key = jax.random.PRNGKey(0)
    k_x, k_w, k_x2, k_w2, k_s2 = jax.random.split(key, 5)

    # ---- Small config (resident-weight path), as in the module defaults scaled down.
    batch, feat_dim, num_classes, num_head = 2, 32, 8, 2
    head_dim = feat_dim // num_head
    head_class = num_classes // num_head

    x = jax.random.normal(k_x, (batch, feat_dim), dtype=jnp.float32)
    label = jnp.zeros((batch,), dtype=jnp.int32)  # unused, interface parity only
    bound = 1.0 / (head_dim ** 0.5)
    weights = jax.random.uniform(k_w, (num_head, head_class, head_dim),
                                 dtype=jnp.float32, minval=-bound, maxval=bound)
    scales = jnp.ones((num_classes,), dtype=jnp.float32)

    x_split = jnp.split(x, num_head, axis=1)
    ref = jnp.concatenate([xh @ weights[h].T for h, xh in enumerate(x_split)],
                          axis=1) * scales

    logits, aux = dot_product_classifier_forward(x, label, weights, scales,
                                                 num_head=num_head)
    logits = jax.block_until_ready(logits)
    assert aux is None
    assert logits.shape == (batch, num_classes)
    assert jnp.allclose(logits, ref, atol=1e-5, rtol=1e-5)

    # bf16 compute path (halves streamed bytes; f32 MXU accumulation).
    logits_bf16, _ = dot_product_classifier_forward(
        x, label, weights, scales, num_head=num_head, compute_dtype=jnp.bfloat16)
    logits_bf16 = jax.block_until_ready(logits_bf16)
    assert jnp.allclose(logits_bf16, ref, atol=5e-2, rtol=5e-2)

    # ---- Medium, 128-aligned config exercising the weight-streaming path.
    b2, fd2, nc2, nh2 = 16, 256, 256, 2
    hd2, hc2 = fd2 // nh2, nc2 // nh2
    x2 = jax.random.normal(k_x2, (b2, fd2), dtype=jnp.float32)
    w2 = jax.random.uniform(k_w2, (nh2, hc2, hd2), dtype=jnp.float32,
                            minval=-1.0 / (hd2 ** 0.5), maxval=1.0 / (hd2 ** 0.5))
    s2 = jax.random.uniform(k_s2, (nc2,), dtype=jnp.float32, minval=0.5, maxval=1.5)

    x2_split = jnp.split(x2, nh2, axis=1)
    ref2 = jnp.concatenate(
        [jnp.einsum("bd,cd->bc", x2_split[h], w2[h],
                    precision=jax.lax.Precision.HIGHEST) for h in range(nh2)],
        axis=1) * s2

    logits2, _ = dot_product_classifier_forward(
        x2, jnp.zeros((b2,), jnp.int32), w2, s2, num_head=nh2,
        weight_streaming=True)
    logits2 = jax.block_until_ready(logits2)
    assert logits2.shape == (b2, nc2)
    assert jnp.allclose(logits2, ref2, atol=2e-3, rtol=2e-3)

    print("KERNEL_OK")
</pallas_src>

<mosaic_0001>
module attributes {stable_mosaic.version = 11 : i64} {
  func.func @_resident_kernel(%arg0: i32, %arg1: memref<2x32xf32, #tpu.memory_space<vmem>>, %arg2: memref<2x16x4xf32, #tpu.memory_space<vmem>>, %arg3: memref<2x8xf32, #tpu.memory_space<vmem>>) attributes {dimension_semantics = [#tpu.dimension_semantics<parallel>], iteration_bounds = array<i64: 1>, scalar_prefetch = 0 : i64, scratch_operands = 0 : i64, tpu.core_type = #tpu.core_type<tc>, window_params = [{transform_indices = @transform_0, window_bounds = array<i64: 2, 32>}, {pipeline_mode = #tpu.pipeline_mode<synchronous>, transform_indices = @transform_1, window_bounds = array<i64: 2, 16, 4>}, {transform_indices = @transform_2, window_bounds = array<i64: 2, 8>}]} {
    %c0 = arith.constant 0 : index
    %c0_0 = arith.constant 0 : index
    %0 = vector.load %arg1[%c0, %c0_0] : memref<2x32xf32, #tpu.memory_space<vmem>>, vector<2x16xf32>
    %c0_1 = arith.constant 0 : index
    %c0_2 = arith.constant 0 : index
    %c0_3 = arith.constant 0 : index
    %1 = vector.load %arg2[%c0_1, %c0_2, %c0_3] : memref<2x16x4xf32, #tpu.memory_space<vmem>>, vector<1x16x4xf32>
    %2 = vector.shape_cast %1 : vector<1x16x4xf32> to vector<16x4xf32>
    %cst = arith.constant dense<0.000000e+00> : vector<2x4xf32>
    %3 = tpu.matmul %0, %2, %cst {dimension_numbers = #tpu.dot_dimension_numbers<[1], [0], [0], [1], [0, 0, 1, 1], [], []>} : vector<2x16xf32>, vector<16x4xf32>, vector<2x4xf32> -> vector<2x4xf32>
    %c0_4 = arith.constant 0 : index
    %c0_5 = arith.constant 0 : index
    %4 = vector.load %arg3[%c0_4, %c0_5] : memref<2x8xf32, #tpu.memory_space<vmem>>, vector<2x4xf32>
    tpu.vector_store %arg3[%c0_4, %c0_5], %3 {strides = array<i32>} : memref<2x8xf32, #tpu.memory_space<vmem>>, vector<2x4xf32>,
    %c0_6 = arith.constant 0 : index
    %c16 = arith.constant 16 : index
    %5 = vector.load %arg1[%c0_6, %c16] : memref<2x32xf32, #tpu.memory_space<vmem>>, vector<2x16xf32>
    %c1 = arith.constant 1 : index
    %c0_7 = arith.constant 0 : index
    %c0_8 = arith.constant 0 : index
    %6 = vector.load %arg2[%c1, %c0_7, %c0_8] : memref<2x16x4xf32, #tpu.memory_space<vmem>>, vector<1x16x4xf32>
    %7 = vector.shape_cast %6 : vector<1x16x4xf32> to vector<16x4xf32>
    %cst_9 = arith.constant dense<0.000000e+00> : vector<2x4xf32>
    %8 = tpu.matmul %5, %7, %cst_9 {dimension_numbers = #tpu.dot_dimension_numbers<[1], [0], [0], [1], [0, 0, 1, 1], [], []>} : vector<2x16xf32>, vector<16x4xf32>, vector<2x4xf32> -> vector<2x4xf32>
    %c0_10 = arith.constant 0 : index
    %c4 = arith.constant 4 : index
    %9 = vector.load %arg3[%c0_10, %c4] : memref<2x8xf32, #tpu.memory_space<vmem>>, vector<2x4xf32>
    tpu.vector_store %arg3[%c0_10, %c4], %8 {strides = array<i32>} : memref<2x8xf32, #tpu.memory_space<vmem>>, vector<2x4xf32>,
    return
  }
  func.func @transform_0(%arg0: i32) -> (i32, i32) {
    %c0_i32 = arith.constant 0 : i32
    %c0_i32_0 = arith.constant 0 : i32
    return %arg0, %c0_i32 : i32, i32
  }
  func.func @transform_1(%arg0: i32) -> (i32, i32, i32) {
    %c0_i32 = arith.constant 0 : i32
    %c0_i32_0 = arith.constant 0 : i32
    %c0_i32_1 = arith.constant 0 : i32
    %c0_i32_2 = arith.constant 0 : i32
    return %c0_i32, %c0_i32_0, %c0_i32_1 : i32, i32, i32
  }
  func.func @transform_2(%arg0: i32) -> (i32, i32) {
    %c0_i32 = arith.constant 0 : i32
    %c0_i32_0 = arith.constant 0 : i32
    return %arg0, %c0_i32 : i32, i32
  }
}

module attributes {stable_mosaic.version = 11 : i64} {
  func.func @_resident_kernel(%arg0: i32, %arg1: memref<2x32xf32, #tpu.memory_space<vmem>>, %arg2: memref<2x16x4xf32, #tpu.memory_space<vmem>>, %arg3: memref<2x8xf32, #tpu.memory_space<vmem>>) attributes {dimension_semantics = [#tpu.dimension_semantics<parallel>], iteration_bounds = array<i64: 1>, scalar_prefetch = 0 : i64, scratch_operands = 0 : i64, tpu.core_type = #tpu.core_type<tc>, window_params = [{transform_indices = @transform_0, window_bounds = array<i64: 2, 32>}, {pipeline_mode = #tpu.pipeline_mode<synchronous>, transform_indices = @transform_1, window_bounds = array<i64: 2, 16, 4>}, {transform_indices = @transform_2, window_bounds = array<i64: 2, 8>}]} {
    %c0 = arith.constant 0 : index
    %c0_0 = arith.constant 0 : index
    %0 = vector.load %arg1[%c0, %c0_0] : memref<2x32xf32, #tpu.memory_space<vmem>>, vector<2x16xf32>
    %c0_1 = arith.constant 0 : index
    %c0_2 = arith.constant 0 : index
    %c0_3 = arith.constant 0 : index
    %1 = vector.load %arg2[%c0_1, %c0_2, %c0_3] : memref<2x16x4xf32, #tpu.memory_space<vmem>>, vector<1x16x4xf32>
    %2 = vector.shape_cast %1 : vector<1x16x4xf32> to vector<16x4xf32>
    %cst = arith.constant dense<0.000000e+00> : vector<2x4xf32>
    %3 = tpu.matmul %0, %2, %cst {dimension_numbers = #tpu.dot_dimension_numbers<[1], [0], [0], [1], [0, 0, 1, 1], [], []>} : vector<2x16xf32>, vector<16x4xf32>, vector<2x4xf32> -> vector<2x4xf32>
    %c0_4 = arith.constant 0 : index
    %c0_5 = arith.constant 0 : index
    %4 = vector.load %arg3[%c0_4, %c0_5] : memref<2x8xf32, #tpu.memory_space<vmem>>, vector<2x4xf32>
    tpu.vector_store %arg3[%c0_4, %c0_5], %3 {strides = array<i32>} : memref<2x8xf32, #tpu.memory_space<vmem>>, vector<2x4xf32>,
    %c0_6 = arith.constant 0 : index
    %c16 = arith.constant 16 : index
    %5 = vector.load %arg1[%c0_6, %c16] : memref<2x32xf32, #tpu.memory_space<vmem>>, vector<2x16xf32>
    %c1 = arith.constant 1 : index
    %c0_7 = arith.constant 0 : index
    %c0_8 = arith.constant 0 : index
    %6 = vector.load %arg2[%c1, %c0_7, %c0_8] : memref<2x16x4xf32, #tpu.memory_space<vmem>>, vector<1x16x4xf32>
    %7 = vector.shape_cast %6 : vector<1x16x4xf32> to vector<16x4xf32>
    %cst_9 = arith.constant dense<0.000000e+00> : vector<2x4xf32>
    %8 = tpu.matmul %5, %7, %cst_9 {dimension_numbers = #tpu.dot_dimension_numbers<[1], [0], [0], [1], [0, 0, 1, 1], [], []>} : vector<2x16xf32>, vector<16x4xf32>, vector<2x4xf32> -> vector<2x4xf32>
    %c0_10 = arith.constant 0 : index
    %c4 = arith.constant 4 : index
    %9 = vector.load %arg3[%c0_10, %c4] : memref<2x8xf32, #tpu.memory_space<vmem>>, vector<2x4xf32>
    tpu.vector_store %arg3[%c0_10, %c4], %8 {strides = array<i32>} : memref<2x8xf32, #tpu.memory_space<vmem>>, vector<2x4xf32>,
    return
  }
  func.func @transform_0(%arg0: i32) -> (i32, i32) {
    %c0_i32 = arith.constant 0 : i32
    %c0_i32_0 = arith.constant 0 : i32
    return %arg0, %c0_i32 : i32, i32
  }
  func.func @transform_1(%arg0: i32) -> (i32, i32, i32) {
    %c0_i32 = arith.constant 0 : i32
    %c0_i32_0 = arith.constant 0 : i32
    %c0_i32_1 = arith.constant 0 : i32
    %c0_i32_2 = arith.constant 0 : i32
    return %c0_i32, %c0_i32_0, %c0_i32_1 : i32, i32, i32
  }
  func.func @transform_2(%arg0: i32) -> (i32, i32) {
    %c0_i32 = arith.constant 0 : i32
    %c0_i32_0 = arith.constant 0 : i32
    return %arg0, %c0_i32 : i32, i32
  }
}

</mosaic_0001>

<llo_original>
// kernel: tpu_custom_call.1
$region0: #{tpu_custom_call.1}
  #allocation0 [shape = 'u32[]', space=smem, size = 0x4, offset = 0x4, fixed_abs, tag = 'smem constant byte address 0x4 - core index']
  #allocation1 [shape = 'u32[144,128]{1,0:T(1,128)}', space=vmem, size = 0x12000, scoped, tag = 'internal scratch']
  %s0 = inlined_call_operand.vmem [shape: f32[2,32], index: 0, kind: input, shape index: {}]
  %s1 = inlined_call_operand.vmem [shape: f32[2,16,4], index: 1, kind: input, shape index: {}]
  %s2 = inlined_call_operand.hbm [shape: f32[2,8], index: 2, kind: output, shape index: {}]
  %s3 = sld [smem:[#allocation0]]
  $region18: #{tpu_custom_call.1} parent=0
    _
  %s5 = ssub.s32 1, %s3
  %s6 = scalar_select 0, %s5, %s3
  $region1: #{tpu_custom_call.1} parent=0
    #allocation2 [shape = 'u8[1024]{0}', space=vmem, size = 0x400, scoped, tag = 'output window, operand 0, single buffered']
    #allocation3 [shape = 's32[1]{0}', space=sflag, size = 0x4, scoped, tag = 'scoped memory for tpu_custom_call.1']
    %7 = vsyncpa [#allocation3], 0
    // Predicated region
    $region2: #{tpu_custom_call.1} parent=1 // pred_check
      _
    $region3: #{tpu_custom_call.1} parent=1 // pred_check_branch
      %9 = sbr.rel (0) target = $region5
    $region4: #{tpu_custom_call.1} parent=1 // pred_region
      _
    $region5: #{tpu_custom_call.1} parent=1 // pred_fallthru
      _
    // Predicated region
    $region6: #{tpu_custom_call.1} parent=1 // pred_check
      _
    $region7: #{tpu_custom_call.1} parent=1 // pred_check_branch
      %11 = sbr.rel (0) target = $region9
    $region8: #{tpu_custom_call.1} parent=1 // pred_region
      _
    $region9: #{tpu_custom_call.1} parent=1 // pred_fallthru
      _
    %v12 = vld [vmem:[%s0] sm:$0x3]
    %v13 = vld [vmem:[%s1] sm:$0xff]
    %v14 = vld [vmem:[%s1 + $0x8] sm:$0xff]
    %vm15 = vcmask 130048
    %v17 = vsel %vm15, %v12, 0
    %19 = vmatprep.subr.mxu0 0.0
    %20 = vmatpush1.msra.mxu0 %v13
    %21 = vmatprep.subr.mxu0 0.0
    %22 = vmatpush1.msra.mxu0 %v14
    %23 = vmatprep.subr.mxu0 0.0
    %24 = vmatpush1.msra.mxu0 0.0
    %25 = vmatprep.subr.mxu0 0.0
    %26 = vmatpush1.msra.mxu0 0.0
    %27 = vmatprep.subr.mxu0 0.0
    %28 = vmatpush1.msra.mxu0 0.0
    %29 = vmatprep.subr.mxu0 0.0
    %30 = vmatpush1.msra.mxu0 0.0
    %31 = vmatprep.subr.mxu0 0.0
    %32 = vmatpush1.msra.mxu0 0.0
    %33 = vmatprep.subr.mxu0 0.0
    %34 = vmatpush1.msra.mxu0 0.0
    %35 = vmatprep.subr.mxu0 0.0
    %36 = vmatpush1.msra.mxu0 0.0
    %37 = vmatprep.subr.mxu0 0.0
    %38 = vmatpush1.msra.mxu0 0.0
    %39 = vmatprep.subr.mxu0 0.0
    %40 = vmatpush1.msra.mxu0 0.0
    %41 = vmatprep.subr.mxu0 0.0
    %42 = vmatpush1.msra.mxu0 0.0
    %43 = vmatprep.subr.mxu0 0.0
    %44 = vmatpush1.msra.mxu0 0.0
    %45 = vmatprep.subr.mxu0 0.0
    %46 = vmatpush1.msra.mxu0 0.0
    %47 = vmatprep.subr.mxu0 0.0
    %48 = vmatpush1.msra.mxu0 0.0
    %49 = vmatprep.subr.mxu0 0.0
    %50 = vmatpush1.msra.mxu0 0.0
    %51 = vmatprep.subr.mxu0 0.0
    %52 = vmatpush1.msra.mxu0 0.0
    %53 = vmatprep.subr.mxu0 0.0
    %54 = vmatpush1.msra.mxu0 0.0
    %55 = vmatprep.subr.mxu0 0.0
    %56 = vmatpush1.msra.mxu0 0.0
    %57 = vmatprep.subr.mxu0 0.0
    %58 = vmatpush1.msra.mxu0 0.0
    %59 = vmatprep.subr.mxu0 0.0
    %60 = vmatpush1.msra.mxu0 0.0
    %61 = vmatprep.subr.mxu0 0.0
    %62 = vmatpush1.msra.mxu0 0.0
    %63 = vmatprep.subr.mxu0 0.0
    %64 = vmatpush1.msra.mxu0 0.0
    %65 = vmatprep.subr.mxu0 0.0
    %66 = vmatpush1.msra.mxu0 0.0
    %67 = vmatprep.subr.mxu0 0.0
    %68 = vmatpush1.msra.mxu0 0.0
    %69 = vmatprep.subr.mxu0 0.0
    %70 = vmatpush1.msra.mxu0 0.0
    %71 = vmatprep.subr.mxu0 0.0
    %72 = vmatpush1.msra.mxu0 0.0
    %73 = vmatprep.subr.mxu0 0.0
    %74 = vmatpush1.msra.mxu0 0.0
    %75 = vmatprep.subr.mxu0 0.0
    %76 = vmatpush1.msra.mxu0 0.0
    %77 = vmatprep.subr.mxu0 0.0
    %78 = vmatpush1.msra.mxu0 0.0
    %79 = vmatprep.subr.mxu0 0.0
    %80 = vmatpush1.msra.mxu0 0.0
    %81 = vmatprep.subr.mxu0 0.0
    %82 = vmatpush1.msra.mxu0 0.0
    %83 = vmatprep.mubr.f32.mxu0 0.0
    %84 = vmatmul.mubr.f32.gmra.mrb[0].mxu0 %v17
    %v85 = vpop.f32.mrb[0].mxu0
    %v86 = vadd.f32 0.0, %v85
    %v87 = vpop.f32.mrb[0].mxu0
    %88 = vdwg.mxu0
    %vm89 = vcmask 25600
    %90 = vst.msk [vmem:[#allocation2] sm:$0x3] %vm89, %v86
    %v91 = vld [vmem:[%s0] sm:$0x3]
    %s92 = scalar_lea.vmem %s1, 16
    %v93 = vld [vmem:[%s92] sm:$0xff]
    %v94 = vld [vmem:[%s92 + $0x8] sm:$0xff]
    %96 = vrot.lane.b32.xlu0 %v91, 112
    %v97 = vpop.permute.xlu0 %96
    %v98 = vsel %vm15, %v97, 0
    %100 = vmatprep.subr.mxu0 0.0
    %101 = vmatpush1.msra.mxu0 %v93
    %102 = vmatprep.subr.mxu0 0.0
    %103 = vmatpush1.msra.mxu0 %v94
    %104 = vmatprep.subr.mxu0 0.0
    %105 = vmatpush1.msra.mxu0 0.0
    %106 = vmatprep.subr.mxu0 0.0
    %107 = vmatpush1.msra.mxu0 0.0
    %108 = vmatprep.subr.mxu0 0.0
    %109 = vmatpush1.msra.mxu0 0.0
    %110 = vmatprep.subr.mxu0 0.0
    %111 = vmatpush1.msra.mxu0 0.0
    %112 = vmatprep.subr.mxu0 0.0
    %113 = vmatpush1.msra.mxu0 0.0
    %114 = vmatprep.subr.mxu0 0.0
    %115 = vmatpush1.msra.mxu0 0.0
    %116 = vmatprep.subr.mxu0 0.0
    %117 = vmatpush1.msra.mxu0 0.0
    %118 = vmatprep.subr.mxu0 0.0
    %119 = vmatpush1.msra.mxu0 0.0
    %120 = vmatprep.subr.mxu0 0.0
    %121 = vmatpush1.msra.mxu0 0.0
    %122 = vmatprep.subr.mxu0 0.0
    %123 = vmatpush1.msra.mxu0 0.0
    %124 = vmatprep.subr.mxu0 0.0
    %125 = vmatpush1.msra.mxu0 0.0
    %126 = vmatprep.subr.mxu0 0.0
    %127 = vmatpush1.msra.mxu0 0.0
    %128 = vmatprep.subr.mxu0 0.0
    %129 = vmatpush1.msra.mxu0 0.0
    %130 = vmatprep.subr.mxu0 0.0
    %131 = vmatpush1.msra.mxu0 0.0
    %132 = vmatprep.subr.mxu0 0.0
    %133 = vmatpush1.msra.mxu0 0.0
    %134 = vmatprep.subr.mxu0 0.0
    %135 = vmatpush1.msra.mxu0 0.0
    %136 = vmatprep.subr.mxu0 0.0
    %137 = vmatpush1.msra.mxu0 0.0
    %138 = vmatprep.subr.mxu0 0.0
    %139 = vmatpush1.msra.mxu0 0.0
    %140 = vmatprep.subr.mxu0 0.0
    %141 = vmatpush1.msra.mxu0 0.0
    %142 = vmatprep.subr.mxu0 0.0
    %143 = vmatpush1.msra.mxu0 0.0
    %144 = vmatprep.subr.mxu0 0.0
    %145 = vmatpush1.msra.mxu0 0.0
    %146 = vmatprep.subr.mxu0 0.0
    %147 = vmatpush1.msra.mxu0 0.0
    %148 = vmatprep.subr.mxu0 0.0
    %149 = vmatpush1.msra.mxu0 0.0
    %150 = vmatprep.subr.mxu0 0.0
    %151 = vmatpush1.msra.mxu0 0.0
    %152 = vmatprep.subr.mxu0 0.0
    %153 = vmatpush1.msra.mxu0 0.0
    %154 = vmatprep.subr.mxu0 0.0
    %155 = vmatpush1.msra.mxu0 0.0
    %156 = vmatprep.subr.mxu0 0.0
    %157 = vmatpush1.msra.mxu0 0.0
    %158 = vmatprep.subr.mxu0 0.0
    %159 = vmatpush1.msra.mxu0 0.0
    %160 = vmatprep.subr.mxu0 0.0
    %161 = vmatpush1.msra.mxu0 0.0
    %162 = vmatprep.subr.mxu0 0.0
    %163 = vmatpush1.msra.mxu0 0.0
    %164 = vmatprep.mubr.f32.mxu0 0.0
    %165 = vmatmul.mubr.f32.gmra.mrb[0].mxu0 %v98
    %v166 = vpop.f32.mrb[0].mxu0
    %v167 = vadd.f32 0.0, %v166
    %v168 = vpop.f32.mrb[0].mxu0
    %169 = vdwg.mxu0
    %171 = vrot.lane.b32.xlu0 %v167, 4
    %v172 = vpop.permute.xlu0 %171
    %vm174 = vcmask 58400
    %175 = vst.msk [vmem:[#allocation2] sm:$0x3] %vm174, %v172
    // Predicated region
    $region10: #{tpu_custom_call.1} parent=1 // pred_check
      _
    $region11: #{tpu_custom_call.1} parent=1 // pred_check_branch
      %177 = sbr.rel (0) target = $region13
    $region12: #{tpu_custom_call.1} parent=1 // pred_region
      %s179 = ssub.s32 32, 32
      %180 = vsyncadd [#allocation3], %s179
      %s182 = sshll.u32 [#allocation2], 4
      %s183 = int_to_ptr.vmem [resolvable:$true] %s182
      %185 = dma.vmem_to_hbm [thread:$0]  %s183, 32, %s2, [#allocation3]
    $region13: #{tpu_custom_call.1} parent=1 // pred_fallthru
      _
    // Predicated region
    $region14: #{tpu_custom_call.1} parent=1 // pred_check
      _
    $region15: #{tpu_custom_call.1} parent=1 // pred_check_branch
      %187 = sbr.rel (0) target = $region17
    $region16: #{tpu_custom_call.1} parent=1 // pred_region
      %188 = dma.done [#allocation3], 32
    $region17: #{tpu_custom_call.1} parent=1 // pred_fallthru
      _
    %189 = vsyncpa [#allocation3], 1

// kernel: tpu_custom_call.1
$region0: #{tpu_custom_call.1}
  #allocation0 [shape = 'u32[]', space=smem, size = 0x4, offset = 0x4, fixed_abs, tag = 'smem constant byte address 0x4 - core index']
  #allocation1 [shape = 'u32[144,128]{1,0:T(1,128)}', space=vmem, size = 0x12000, scoped, tag = 'internal scratch']
  %s0 = inlined_call_operand.vmem [shape: f32[2,32], index: 0, kind: input, shape index: {}]
  %s1 = inlined_call_operand.vmem [shape: f32[2,16,4], index: 1, kind: input, shape index: {}]
  %s2 = inlined_call_operand.hbm [shape: f32[2,8], index: 2, kind: output, shape index: {}]
  %s3 = sld [smem:[#allocation0]]
  $region18: #{tpu_custom_call.1} parent=0
    _
  %s5 = ssub.s32 1, %s3
  %s6 = scalar_select 0, %s5, %s3
  $region1: #{tpu_custom_call.1} parent=0
    #allocation2 [shape = 'u8[1024]{0}', space=vmem, size = 0x400, scoped, tag = 'output window, operand 0, single buffered']
    #allocation3 [shape = 's32[1]{0}', space=sflag, size = 0x4, scoped, tag = 'scoped memory for tpu_custom_call.1']
    %7 = vsyncpa [#allocation3], 0
    // Predicated region
    $region2: #{tpu_custom_call.1} parent=1 // pred_check
      _
    $region3: #{tpu_custom_call.1} parent=1 // pred_check_branch
      %9 = sbr.rel (0) target = $region5
    $region4: #{tpu_custom_call.1} parent=1 // pred_region
      _
    $region5: #{tpu_custom_call.1} parent=1 // pred_fallthru
      _
    // Predicated region
    $region6: #{tpu_custom_call.1} parent=1 // pred_check
      _
    $region7: #{tpu_custom_call.1} parent=1 // pred_check_branch
      %11 = sbr.rel (0) target = $region9
    $region8: #{tpu_custom_call.1} parent=1 // pred_region
      _
    $region9: #{tpu_custom_call.1} parent=1 // pred_fallthru
      _
    %v12 = vld [vmem:[%s0] sm:$0x3]
    %v13 = vld [vmem:[%s1] sm:$0xff]
    %v14 = vld [vmem:[%s1 + $0x8] sm:$0xff]
    %vm15 = vcmask 130048
    %v17 = vsel %vm15, %v12, 0
    %19 = vmatprep.subr.mxu0 0.0
    %20 = vmatpush1.msra.mxu0 %v13
    %21 = vmatprep.subr.mxu0 0.0
    %22 = vmatpush1.msra.mxu0 %v14
    %23 = vmatprep.subr.mxu0 0.0
    %24 = vmatpush1.msra.mxu0 0.0
    %25 = vmatprep.subr.mxu0 0.0
    %26 = vmatpush1.msra.mxu0 0.0
    %27 = vmatprep.subr.mxu0 0.0
    %28 = vmatpush1.msra.mxu0 0.0
    %29 = vmatprep.subr.mxu0 0.0
    %30 = vmatpush1.msra.mxu0 0.0
    %31 = vmatprep.subr.mxu0 0.0
    %32 = vmatpush1.msra.mxu0 0.0
    %33 = vmatprep.subr.mxu0 0.0
    %34 = vmatpush1.msra.mxu0 0.0
    %35 = vmatprep.subr.mxu0 0.0
    %36 = vmatpush1.msra.mxu0 0.0
    %37 = vmatprep.subr.mxu0 0.0
    %38 = vmatpush1.msra.mxu0 0.0
    %39 = vmatprep.subr.mxu0 0.0
    %40 = vmatpush1.msra.mxu0 0.0
    %41 = vmatprep.subr.mxu0 0.0
    %42 = vmatpush1.msra.mxu0 0.0
    %43 = vmatprep.subr.mxu0 0.0
    %44 = vmatpush1.msra.mxu0 0.0
    %45 = vmatprep.subr.mxu0 0.0
    %46 = vmatpush1.msra.mxu0 0.0
    %47 = vmatprep.subr.mxu0 0.0
    %48 = vmatpush1.msra.mxu0 0.0
    %49 = vmatprep.subr.mxu0 0.0
    %50 = vmatpush1.msra.mxu0 0.0
    %51 = vmatprep.subr.mxu0 0.0
    %52 = vmatpush1.msra.mxu0 0.0
    %53 = vmatprep.subr.mxu0 0.0
    %54 = vmatpush1.msra.mxu0 0.0
    %55 = vmatprep.subr.mxu0 0.0
    %56 = vmatpush1.msra.mxu0 0.0
    %57 = vmatprep.subr.mxu0 0.0
    %58 = vmatpush1.msra.mxu0 0.0
    %59 = vmatprep.subr.mxu0 0.0
    %60 = vmatpush1.msra.mxu0 0.0
    %61 = vmatprep.subr.mxu0 0.0
    %62 = vmatpush1.msra.mxu0 0.0
    %63 = vmatprep.subr.mxu0 0.0
    %64 = vmatpush1.msra.mxu0 0.0
    %65 = vmatprep.subr.mxu0 0.0
    %66 = vmatpush1.msra.mxu0 0.0
    %67 = vmatprep.subr.mxu0 0.0
    %68 = vmatpush1.msra.mxu0 0.0
    %69 = vmatprep.subr.mxu0 0.0
    %70 = vmatpush1.msra.mxu0 0.0
    %71 = vmatprep.subr.mxu0 0.0
    %72 = vmatpush1.msra.mxu0 0.0
    %73 = vmatprep.subr.mxu0 0.0
    %74 = vmatpush1.msra.mxu0 0.0
    %75 = vmatprep.subr.mxu0 0.0
    %76 = vmatpush1.msra.mxu0 0.0
    %77 = vmatprep.subr.mxu0 0.0
    %78 = vmatpush1.msra.mxu0 0.0
    %79 = vmatprep.subr.mxu0 0.0
    %80 = vmatpush1.msra.mxu0 0.0
    %81 = vmatprep.subr.mxu0 0.0
    %82 = vmatpush1.msra.mxu0 0.0
    %83 = vmatprep.mubr.f32.mxu0 0.0
    %84 = vmatmul.mubr.f32.gmra.mrb[0].mxu0 %v17
    %v85 = vpop.f32.mrb[0].mxu0
    %v86 = vadd.f32 0.0, %v85
    %v87 = vpop.f32.mrb[0].mxu0
    %88 = vdwg.mxu0
    %vm89 = vcmask 25600
    %90 = vst.msk [vmem:[#allocation2] sm:$0x3] %vm89, %v86
    %v91 = vld [vmem:[%s0] sm:$0x3]
    %s92 = scalar_lea.vmem %s1, 16
    %v93 = vld [vmem:[%s92] sm:$0xff]
    %v94 = vld [vmem:[%s92 + $0x8] sm:$0xff]
    %96 = vrot.lane.b32.xlu0 %v91, 112
    %v97 = vpop.permute.xlu0 %96
    %v98 = vsel %vm15, %v97, 0
    %100 = vmatprep.subr.mxu0 0.0
    %101 = vmatpush1.msra.mxu0 %v93
    %102 = vmatprep.subr.mxu0 0.0
    %103 = vmatpush1.msra.mxu0 %v94
    %104 = vmatprep.subr.mxu0 0.0
    %105 = vmatpush1.msra.mxu0 0.0
    %106 = vmatprep.subr.mxu0 0.0
    %107 = vmatpush1.msra.mxu0 0.0
    %108 = vmatprep.subr.mxu0 0.0
    %109 = vmatpush1.msra.mxu0 0.0
    %110 = vmatprep.subr.mxu0 0.0
    %111 = vmatpush1.msra.mxu0 0.0
    %112 = vmatprep.subr.mxu0 0.0
    %113 = vmatpush1.msra.mxu0 0.0
    %114 = vmatprep.subr.mxu0 0.0
    %115 = vmatpush1.msra.mxu0 0.0
    %116 = vmatprep.subr.mxu0 0.0
    %117 = vmatpush1.msra.mxu0 0.0
    %118 = vmatprep.subr.mxu0 0.0
    %119 = vmatpush1.msra.mxu0 0.0
    %120 = vmatprep.subr.mxu0 0.0
    %121 = vmatpush1.msra.mxu0 0.0
    %122 = vmatprep.subr.mxu0 0.0
    %123 = vmatpush1.msra.mxu0 0.0
    %124 = vmatprep.subr.mxu0 0.0
    %125 = vmatpush1.msra.mxu0 0.0
    %126 = vmatprep.subr.mxu0 0.0
    %127 = vmatpush1.msra.mxu0 0.0
    %128 = vmatprep.subr.mxu0 0.0
    %129 = vmatpush1.msra.mxu0 0.0
    %130 = vmatprep.subr.mxu0 0.0
    %131 = vmatpush1.msra.mxu0 0.0
    %132 = vmatprep.subr.mxu0 0.0
    %133 = vmatpush1.msra.mxu0 0.0
    %134 = vmatprep.subr.mxu0 0.0
    %135 = vmatpush1.msra.mxu0 0.0
    %136 = vmatprep.subr.mxu0 0.0
    %137 = vmatpush1.msra.mxu0 0.0
    %138 = vmatprep.subr.mxu0 0.0
    %139 = vmatpush1.msra.mxu0 0.0
    %140 = vmatprep.subr.mxu0 0.0
    %141 = vmatpush1.msra.mxu0 0.0
    %142 = vmatprep.subr.mxu0 0.0
    %143 = vmatpush1.msra.mxu0 0.0
    %144 = vmatprep.subr.mxu0 0.0
    %145 = vmatpush1.msra.mxu0 0.0
    %146 = vmatprep.subr.mxu0 0.0
    %147 = vmatpush1.msra.mxu0 0.0
    %148 = vmatprep.subr.mxu0 0.0
    %149 = vmatpush1.msra.mxu0 0.0
    %150 = vmatprep.subr.mxu0 0.0
    %151 = vmatpush1.msra.mxu0 0.0
    %152 = vmatprep.subr.mxu0 0.0
    %153 = vmatpush1.msra.mxu0 0.0
    %154 = vmatprep.subr.mxu0 0.0
    %155 = vmatpush1.msra.mxu0 0.0
    %156 = vmatprep.subr.mxu0 0.0
    %157 = vmatpush1.msra.mxu0 0.0
    %158 = vmatprep.subr.mxu0 0.0
    %159 = vmatpush1.msra.mxu0 0.0
    %160 = vmatprep.subr.mxu0 0.0
    %161 = vmatpush1.msra.mxu0 0.0
    %162 = vmatprep.subr.mxu0 0.0
    %163 = vmatpush1.msra.mxu0 0.0
    %164 = vmatprep.mubr.f32.mxu0 0.0
    %165 = vmatmul.mubr.f32.gmra.mrb[0].mxu0 %v98
    %v166 = vpop.f32.mrb[0].mxu0
    %v167 = vadd.f32 0.0, %v166
    %v168 = vpop.f32.mrb[0].mxu0
    %169 = vdwg.mxu0
    %171 = vrot.lane.b32.xlu0 %v167, 4
    %v172 = vpop.permute.xlu0 %171
    %vm174 = vcmask 58400
    %175 = vst.msk [vmem:[#allocation2] sm:$0x3] %vm174, %v172
    // Predicated region
    $region10: #{tpu_custom_call.1} parent=1 // pred_check
      _
    $region11: #{tpu_custom_call.1} parent=1 // pred_check_branch
      %177 = sbr.rel (0) target = $region13
    $region12: #{tpu_custom_call.1} parent=1 // pred_region
      %s179 = ssub.s32 32, 32
      %180 = vsyncadd [#allocation3], %s179
      %s182 = sshll.u32 [#allocation2], 4
      %s183 = int_to_ptr.vmem [resolvable:$true] %s182
      %185 = dma.vmem_to_hbm [thread:$0]  %s183, 32, %s2, [#allocation3]
    $region13: #{tpu_custom_call.1} parent=1 // pred_fallthru
      _
    // Predicated region
    $region14: #{tpu_custom_call.1} parent=1 // pred_check
      _
    $region15: #{tpu_custom_call.1} parent=1 // pred_check_branch
      %187 = sbr.rel (0) target = $region17
    $region16: #{tpu_custom_call.1} parent=1 // pred_region
      %188 = dma.done [#allocation3], 32
    $region17: #{tpu_custom_call.1} parent=1 // pred_fallthru
      _
    %189 = vsyncpa [#allocation3], 1

</llo_original>
